<compile_context>
chip_gen: v6e
topology: v6e:2x2x1
jax: 0.10.0
libtpu: 0.0.40
codegen_flags: <defaults>
</compile_context>

<pallas_src>
import jax
import jax.numpy as jnp
from jax.experimental import pallas as pl
from jax.experimental.pallas import tpu as pltpu

_LANES = 128
_MAX_BLOCK_ROWS = 4096   # 4096 x 128 f32 = 2 MiB/buffer; in+out double-buffered ~8 MiB


def _round_up(a, b):
    return -(-a // b) * b


def _mishx_kernel(beta_ref, x_ref, o_ref):
    """Elementwise MishX on one (block_rows, 128) tile.

    beta_ref: (1,) f32 in SMEM
    x_ref, o_ref: (block_rows, 128) in VMEM (any float dtype; compute in f32)
    """
    beta = beta_ref[0]
    x = x_ref[...].astype(jnp.float32)
    # MishX(x) = x * tanh(log((1+exp(x))^beta)) == x * tanh(beta * softplus(x)).
    # Stable softplus: for x > 20, softplus(x) ~= x; clamp exp's argument so no
    # inf is ever generated (3 EUP ops total: exp, log1p, tanh).
    sp = jnp.where(x > 20.0, x, jnp.log1p(jnp.exp(jnp.minimum(x, 20.0))))
    o_ref[...] = (x * jnp.tanh(beta * sp)).astype(o_ref.dtype)


def mishx(x, beta=1.5):
    """Apply MishX activation elementwise to `x` (any shape) via Pallas."""
    orig_shape = x.shape
    dtype = x.dtype
    n = x.size
    if n == 0:
        return x

    itemsize = jnp.dtype(dtype).itemsize
    # Minimum row alignment of a VMEM tile: f32 -> 8, bf16 -> 16, 1-byte -> 32.
    row_align = 8 * max(1, 4 // itemsize)

    # Flatten to a lane-dense 2-D slab (rows, 128). No row padding at all; the
    # partial last grid block is masked by Pallas. Only a non-multiple-of-128
    # element count needs a (rare) lane-padding copy.
    xf = x.reshape(-1)
    ragged = (n % _LANES) != 0
    if ragged:
        # TODO(synk): ragged (numel % 128 != 0) sizes take one extra pad/slice
        # copy; could be removed with an in-kernel lane mask on the last row.
        xf = jnp.pad(xf, (0, (-n) % _LANES))
    rows = xf.shape[0] // _LANES
    x2d = xf.reshape(rows, _LANES)

    # Tile choice: as big as 4096 rows (2 MiB f32), but split into >=2 grid
    # steps when the tensor allows it so v7x's two TensorCores both get work.
    block_rows = min(_MAX_BLOCK_ROWS, _round_up(pl.cdiv(rows, 2), row_align))
    block_rows = max(block_rows, row_align)
    grid = (pl.cdiv(rows, block_rows),)

    beta_arr = jnp.asarray(beta, dtype=jnp.float32).reshape(1)

    # Advisory cost: ~6 flops + 3 transcendentals per element, one HBM read +
    # one HBM write.
    cost = pl.CostEstimate(
        flops=6 * n,
        transcendentals=3 * n,
        bytes_accessed=2 * n * itemsize,
    )

    out2d = pl.pallas_call(
        _mishx_kernel,
        out_shape=jax.ShapeDtypeStruct((rows, _LANES), dtype),
        grid=grid,
        in_specs=[
            pl.BlockSpec(memory_space=pltpu.SMEM),                  # beta scalar
            pl.BlockSpec((block_rows, _LANES), lambda i: (i, 0)),   # x tile
        ],
        out_specs=pl.BlockSpec((block_rows, _LANES), lambda i: (i, 0)),
        compiler_params=pltpu.CompilerParams(
            dimension_semantics=("parallel",),
        ),
        cost_estimate=cost,
    )(beta_arr, x2d)

    out = out2d.reshape(-1)
    if ragged:
        out = out[:n]
    return out.reshape(orig_shape)


def _mishx_ref(x, beta=1.5):
    """Pure-JAX reference, written exactly like the PyTorch module."""
    xf = x.astype(jnp.float32)
    y = xf * jnp.tanh(jnp.log(jnp.power(1.0 + jnp.exp(xf), beta)))
    return y.astype(x.dtype)


if __name__ == "__main__":
    key = jax.random.PRNGKey(0)
    # Small NCHW-like input, consistent with "Input: (N, *)".
    x = jax.random.normal(key, (2, 4, 16, 16), dtype=jnp.float32)

    # beta initialized to the module default (1.5), passed as a traced scalar.
    beta = jnp.float32(1.5)

    y = mishx(x, beta)
    y = jax.block_until_ready(y)

    y_ref = _mishx_ref(x, 1.5)
    assert y.shape == x.shape and y.dtype == x.dtype
    assert jnp.allclose(y, y_ref, atol=1e-5, rtol=1e-5)

    print("KERNEL_OK")
</pallas_src>

<mosaic_0001>
module attributes {stable_mosaic.version = 11 : i64} {
  func.func @_mishx_kernel(%arg0: i32, %arg1: memref<1xf32, #tpu.memory_space<smem>>, %arg2: memref<8x128xf32, #tpu.memory_space<vmem>>, %arg3: memref<8x128xf32, #tpu.memory_space<vmem>>) attributes {dimension_semantics = [#tpu.dimension_semantics<parallel>], iteration_bounds = array<i64: 2>, scalar_prefetch = 0 : i64, scratch_operands = 0 : i64, tpu.core_type = #tpu.core_type<tc>, window_params = [{transform_indices = @transform_0, window_bounds = array<i64: 1>}, {transform_indices = @transform_1, window_bounds = array<i64: 8, 128>}, {transform_indices = @transform_2, window_bounds = array<i64: 8, 128>}]} {
    %c0 = arith.constant 0 : index
    %0 = memref.load %arg1[%c0] : memref<1xf32, #tpu.memory_space<smem>>
    %c0_0 = arith.constant 0 : index
    %c0_1 = arith.constant 0 : index
    %1 = vector.load %arg2[%c0_0, %c0_1] : memref<8x128xf32, #tpu.memory_space<vmem>>, vector<8x128xf32>
    %cst = arith.constant 2.000000e+01 : f32
    %2 = vector.broadcast %cst : f32 to vector<8x128xf32>
    %3 = arith.cmpf ogt, %1, %2 : vector<8x128xf32>
    %cst_2 = arith.constant 2.000000e+01 : f32
    %4 = vector.broadcast %cst_2 : f32 to vector<8x128xf32>
    %5 = arith.minimumf %1, %4 : vector<8x128xf32>
    %6 = math.exp %5 : vector<8x128xf32>
    %7 = math.log1p %6 : vector<8x128xf32>
    %8 = arith.select %3, %1, %7 : vector<8x128xi1>, vector<8x128xf32>
    %9 = vector.broadcast %0 : f32 to vector<8x128xf32>
    %10 = arith.mulf %9, %8 : vector<8x128xf32>
    %11 = math.tanh %10 : vector<8x128xf32>
    %12 = arith.mulf %1, %11 : vector<8x128xf32>
    %c0_3 = arith.constant 0 : index
    %c0_4 = arith.constant 0 : index
    %13 = vector.load %arg3[%c0_3, %c0_4] : memref<8x128xf32, #tpu.memory_space<vmem>>, vector<8x128xf32>
    tpu.vector_store %arg3[%c0_3, %c0_4], %12 {strides = array<i32>} : memref<8x128xf32, #tpu.memory_space<vmem>>, vector<8x128xf32>,
    return
  }
  func.func @transform_0(%arg0: i32) -> i32 {
    %c0_i32 = arith.constant 0 : i32
    %c0_i32_0 = arith.constant 0 : i32
    return %c0_i32 : i32
  }
  func.func @transform_1(%arg0: i32) -> (i32, i32) {
    %c0_i32 = arith.constant 0 : i32
    %c0_i32_0 = arith.constant 0 : i32
    return %arg0, %c0_i32 : i32, i32
  }
  func.func @transform_2(%arg0: i32) -> (i32, i32) {
    %c0_i32 = arith.constant 0 : i32
    %c0_i32_0 = arith.constant 0 : i32
    return %arg0, %c0_i32 : i32, i32
  }
}

</mosaic_0001>

<llo_original>
// kernel: tpu_custom_call.1
$region0: #{tpu_custom_call.1}
  #allocation0 [shape = 'u32[]', space=smem, size = 0x4, offset = 0x4, fixed_abs, tag = 'smem constant byte address 0x4 - core index']
  #allocation1 [shape = 'u32[144,128]{1,0:T(1,128)}', space=vmem, size = 0x12000, scoped, tag = 'internal scratch']
  #allocation2 [shape = 'f32[1]{0:T(128)S(6)}', space=smem, size = 0x200, scoped, tag = 'scoped memory for tpu_custom_call.1']
  %s0 = inlined_call_operand.<no memory space> [shape: f32[1], index: 0, kind: input, shape index: {}]
  %s1 = inlined_call_operand.hbm [shape: f32[16,128], index: 1, kind: input, shape index: {}]
  %s2 = inlined_call_operand.hbm [shape: f32[16,128], index: 2, kind: output, shape index: {}]
  %s3 = sld [smem:[#allocation0]]
  $region45: #{tpu_custom_call.1} parent=0
    _
  %s5 = ssub.s32 1, %s3
  %s6 = scalar_select 0, %s5, %s3
  %7 = sst [smem:[#allocation2]] %s0
  $region1: #{tpu_custom_call.1} parent=0
    #allocation3 [shape = 'u8[8192]{0}', space=vmem, size = 0x2000, scoped, tag = 'input window, operand 1']
    #allocation4 [shape = 's32[2]{0}', space=sflag, size = 0x8, scoped, tag = 'scoped memory for tpu_custom_call.1']
    #allocation5 [shape = 's32[2]{0}', space=sflag, size = 0x8, scoped, tag = 'scoped memory for tpu_custom_call.1']
    #allocation6 [shape = 'u8[8192]{0}', space=vmem, size = 0x2000, scoped, tag = 'output window, operand 0']
    %8 = vsyncpa [#allocation4], 0
    %s9 = scalar_lea.sflag [#allocation4], 1
    %10 = vsyncpa %s9, 0
    %11 = vsyncpa [#allocation5], 0
    %s12 = scalar_lea.sflag [#allocation5], 1
    %13 = vsyncpa %s12, 0
    loop: start=0, step=1, limit=4
    $region2: #{tpu_custom_call.1} parent=1 // loop_pre_header
      _
    $region3: #{tpu_custom_call.1} parent=1 // loop_header
      %s15 = sphi 0, %s19
      %p16 = scmp.ge.s32.totalorder %s15, 4
      %s23 = sphi 0, %s23
      %s25 = sphi 0, %s23
      %s26 = sphi 0, %s25
      %s40 = sphi 0, %s26
      %s46 = sphi 0, %s48
      %s49 = sphi 0, %s46
      %s50 = sphi 0, %s49
      %s66 = sphi 0, %s50
      %s72 = sphi 0, %s74
      %s75 = sphi 0, %s72
      %s76 = sphi 0, %s75
      %s92 = sphi 0, %s76
    $region4: #{tpu_custom_call.1} parent=1 // loop_header_branch
      %18 = sbr.rel (%p16) target = $region8
    $region5: #{tpu_custom_call.1} parent=1 // loop_body
      %s20 = ssub.s32 %s15, 1
      %s21 = ssub.s32 %s15, 2
      %s22 = sadd.s32 %s15, 1
      %s24 = sadd.s32 %s23, 1
      %p27 = scmp.eq.s32.totalorder %s15, 1
      %p28 = scmp.ne.s32.totalorder %s23, %s25
      %p29 = scmp.eq.s32.totalorder %s15, 0
      %p30 = por %p28, %p29
      %p31 = scmp.ne.s32.totalorder %s23, %s25
      %p32 = scmp.eq.s32.totalorder %s20, 1
      %p33 = por %p31, %p32
      %p34 = scmp.ne.s32.totalorder %s25, %s26
      %p35 = scmp.eq.s32.totalorder %s20, 0
      %p36 = por %p34, %p35
      %p37 = scmp.ne.s32.totalorder %s25, %s26
      %p38 = scmp.eq.s32.totalorder %s21, 1
      %p39 = por %p37, %p38
      %p41 = scmp.ne.s32.totalorder %s26, %s40
      %p42 = scmp.eq.s32.totalorder %s21, 0
      %p43 = por %p41, %p42
      %s44 = ssub.s32 %s15, %s22
      %p45 = scmp.eq.s32.totalorder %s44, 0
      %s47 = sadd.s32 %s46, 1
      %s48 = scalar_select %p45, %s46, %s47
      %p51 = pneg %p45
      %p52 = scmp.eq.s32.totalorder %s15, 1
      %p53 = por %p51, %p52
      %p54 = scmp.ne.s32.totalorder %s46, %s49
      %p55 = scmp.eq.s32.totalorder %s15, 0
      %p56 = por %p54, %p55
      %p57 = scmp.ne.s32.totalorder %s46, %s49
      %p58 = scmp.eq.s32.totalorder %s20, 1
      %p59 = por %p57, %p58
      %p60 = scmp.ne.s32.totalorder %s49, %s50
      %p61 = scmp.eq.s32.totalorder %s20, 0
      %p62 = por %p60, %p61
      %p63 = scmp.ne.s32.totalorder %s49, %s50
      %p64 = scmp.eq.s32.totalorder %s21, 1
      %p65 = por %p63, %p64
      %p67 = scmp.ne.s32.totalorder %s50, %s66
      %p68 = scmp.eq.s32.totalorder %s21, 0
      %p69 = por %p67, %p68
      %s70 = ssub.s32 %s15, %s22
      %p71 = scmp.eq.s32.totalorder %s70, 0
      %s73 = sadd.s32 %s72, 1
      %s74 = scalar_select %p71, %s72, %s73
      %p77 = pneg %p71
      %p78 = scmp.eq.s32.totalorder %s15, 1
      %p79 = por %p77, %p78
      %p80 = scmp.ne.s32.totalorder %s72, %s75
      %p81 = scmp.eq.s32.totalorder %s15, 0
      %p82 = por %p80, %p81
      %p83 = scmp.ne.s32.totalorder %s72, %s75
      %p84 = scmp.eq.s32.totalorder %s20, 1
      %p85 = por %p83, %p84
      %p86 = scmp.ne.s32.totalorder %s75, %s76
      %p87 = scmp.eq.s32.totalorder %s20, 0
      %p88 = por %p86, %p87
      %p89 = scmp.ne.s32.totalorder %s75, %s76
      %p90 = scmp.eq.s32.totalorder %s21, 1
      %p91 = por %p89, %p90
      %p93 = scmp.ne.s32.totalorder %s76, %s92
      %p94 = scmp.eq.s32.totalorder %s21, 0
      %p95 = por %p93, %p94
      %p96 = scmp.le.s32.totalorder 1, %s15
      %p97 = scmp.lt.s32.totalorder %s15, 3
      %p98 = pnand %p96, %p97
      %p99 = pneg %p98
      // Predicated region
      $region9: #{tpu_custom_call.1} parent=5 // pred_check
        _
      $region10: #{tpu_custom_call.1} parent=5 // pred_check_branch
        %101 = sbr.rel (%p98) target = $region12
      $region11: #{tpu_custom_call.1} parent=5 // pred_region
        %s102 = ssub.s32 %s15, 1
        // Predicated region
        $region13: #{tpu_custom_call.1} parent=11 // pred_check
          %p103 = pneg %p36
        $region14: #{tpu_custom_call.1} parent=11 // pred_check_branch
          %105 = sbr.rel (%p103) target = $region16
        $region15: #{tpu_custom_call.1} parent=11 // pred_region
          _
        $region16: #{tpu_custom_call.1} parent=11 // pred_fallthru
          _
      $region12: #{tpu_custom_call.1} parent=5 // pred_fallthru
        _
      %p106 = scmp.lt.s32.totalorder %s15, 2
      // Predicated region
      $region17: #{tpu_custom_call.1} parent=5 // pred_check
        %p107 = pneg %p106
      $region18: #{tpu_custom_call.1} parent=5 // pred_check_branch
        %109 = sbr.rel (%p107) target = $region20
      $region19: #{tpu_custom_call.1} parent=5 // pred_region
        // Predicated region
        $region21: #{tpu_custom_call.1} parent=19 // pred_check
          %p110 = pneg %p56
        $region22: #{tpu_custom_call.1} parent=19 // pred_check_branch
          %112 = sbr.rel (%p110) target = $region24
        $region23: #{tpu_custom_call.1} parent=19 // pred_region
          %s113 = sand.u32 %s46, 1
          %s114 = scalar_lea.sflag [#allocation4], %s113
          %s115 = sand.u32 %s46, 1
          %s116 = smul.addr %s115, 8
          %s117 = scalar_lea.vmem [#allocation3], %s116
          %s119 = ssub.s32 128, 128
          %120 = vsyncadd %s114, %s119
          %s121 = smul.addr %s15, 128
          %s122 = scalar_lea.hbm %s1, %s121
          %s124 = sshll.u32 %s117, 4
          %s125 = int_to_ptr.vmem [resolvable:$true] %s124
          %127 = dma.hbm_to_vmem [thread:$0]  %s122, 128, %s125, %s114
        $region24: #{tpu_custom_call.1} parent=19 // pred_fallthru
          _
      $region20: #{tpu_custom_call.1} parent=5 // pred_fallthru
        _
      %p128 = scmp.le.s32.totalorder 1, %s15
      %p129 = scmp.lt.s32.totalorder %s15, 3
      %p130 = pnand %p128, %p129
      %p131 = pneg %p130
      // Predicated region
      $region25: #{tpu_custom_call.1} parent=5 // pred_check
        _
      $region26: #{tpu_custom_call.1} parent=5 // pred_check_branch
        %133 = sbr.rel (%p130) target = $region28
      $region27: #{tpu_custom_call.1} parent=5 // pred_region
        %s134 = ssub.s32 %s15, 1
        %s135 = sand.u32 %s49, 1
        %s136 = scalar_lea.sflag [#allocation4], %s135
        %s137 = sand.u32 %s49, 1
        %s138 = smul.addr %s137, 8
        %s139 = scalar_lea.vmem [#allocation3], %s138
        // Predicated region
        $region29: #{tpu_custom_call.1} parent=27 // pred_check
          %p140 = pneg %p62
        $region30: #{tpu_custom_call.1} parent=27 // pred_check_branch
          %142 = sbr.rel (%p140) target = $region32
        $region31: #{tpu_custom_call.1} parent=27 // pred_region
          %143 = dma.done %s136, 128
        $region32: #{tpu_custom_call.1} parent=27 // pred_fallthru
          _
        %p144 = pneg %p36
        %p145 = pneg %p33
        %s146 = sand.u32 %s49, 1
        %s147 = scalar_lea.sflag [#allocation4], %s146
        %s148 = sand.u32 %s49, 1
        %s149 = smul.addr %s148, 8
        %s150 = scalar_lea.vmem [#allocation3], %s149
        %p151 = pneg %p62
        %p152 = pneg %p59
        %p153 = pneg %p88
        %p154 = pneg %p85
        %s155 = sand.u32 %s75, 1
        %s156 = scalar_lea.sflag [#allocation5], %s155
        %s157 = sand.u32 %s75, 1
        %s158 = smul.addr %s157, 8
        %s159 = scalar_lea.vmem [#allocation6], %s158
        %s160 = sld [smem:[#allocation2]]
        %v161 = vld [vmem:[%s139] sm:$0xff]
        %vm162 = vcmp.gt.f32.partialorder %v161, 20.0
        %v163 = vmin.f32 %v161, 20.0
        %v164 = vmul.f32 %v163, 1.442695
        %v165 = vpow.pop %v164
        %v166 = vadd.f32 %v165, 1.0
        %v167 = vlog2.pop %v166
        %v168 = vmul.f32 %v167, 0.6931472
        %v169 = vmul.f32 -0.5, %v165
        %v170 = vadd.f32 %v169, 1.0
        %v171 = vmul.f32 %v170, %v165
        %v172 = vand.u32 2147483647, %v165
        %vm173 = vcmp.lt.f32.partialorder %v172, 0.0004427343
        %v174 = vsel %vm173, %v171, %v168
        %v175 = vsel %vm162, %v161, %v174
        %v176 = vstv %s160
        %v177 = vmul.f32 %v176, %v175
        %v178 = vtanh.pop %v177
        %v179 = vmul.f32 %v161, %v178
        %180 = vst [vmem:[%s159] sm:$0xff] %v179
        %s181 = sand.u32 %s75, 1
        %s182 = scalar_lea.sflag [#allocation5], %s181
        %s183 = sand.u32 %s75, 1
        %s184 = smul.addr %s183, 8
        %s185 = scalar_lea.vmem [#allocation6], %s184
        // Predicated region
        $region33: #{tpu_custom_call.1} parent=27 // pred_check
          %p186 = pneg %p85
        $region34: #{tpu_custom_call.1} parent=27 // pred_check_branch
          %188 = sbr.rel (%p186) target = $region36
        $region35: #{tpu_custom_call.1} parent=27 // pred_region
          %s190 = ssub.s32 128, 128
          %191 = vsyncadd %s182, %s190
          %s192 = smul.addr %s20, 128
          %s193 = scalar_lea.hbm %s2, %s192
          %s195 = sshll.u32 %s185, 4
          %s196 = int_to_ptr.vmem [resolvable:$true] %s195
          %198 = dma.vmem_to_hbm [thread:$0]  %s196, 128, %s193, %s182
        $region36: #{tpu_custom_call.1} parent=27 // pred_fallthru
          _
      $region28: #{tpu_custom_call.1} parent=5 // pred_fallthru
        _
      %p199 = scmp.le.s32.totalorder 2, %s15
      // Predicated region
      $region37: #{tpu_custom_call.1} parent=5 // pred_check
        %p200 = pneg %p199
      $region38: #{tpu_custom_call.1} parent=5 // pred_check_branch
        %202 = sbr.rel (%p200) target = $region40
      $region39: #{tpu_custom_call.1} parent=5 // pred_region
        %s203 = ssub.s32 %s15, 2
        // Predicated region
        $region41: #{tpu_custom_call.1} parent=39 // pred_check
          %p204 = pneg %p91
        $region42: #{tpu_custom_call.1} parent=39 // pred_check_branch
          %206 = sbr.rel (%p204) target = $region44
        $region43: #{tpu_custom_call.1} parent=39 // pred_region
          %s207 = sand.u32 %s76, 1
          %s208 = scalar_lea.sflag [#allocation5], %s207
          %s209 = sand.u32 %s76, 1
          %s210 = smul.addr %s209, 8
          %s211 = scalar_lea.vmem [#allocation6], %s210
          %212 = dma.done %s208, 128
        $region44: #{tpu_custom_call.1} parent=39 // pred_fallthru
          _
      $region40: #{tpu_custom_call.1} parent=5 // pred_fallthru
        _
    $region6: #{tpu_custom_call.1} parent=1 // loop_footer
      %s19 = sadd.s32 1, %s15
    $region7: #{tpu_custom_call.1} parent=1 // loop_footer_branch
      %14 = sbr.rel target = $region3
    $region8: #{tpu_custom_call.1} parent=1 // loop_exit
      _
    %213 = vsyncpa [#allocation4], 1
    %s214 = scalar_lea.sflag [#allocation4], 1
    %215 = vsyncpa %s214, 1
    %216 = vsyncpa [#allocation5], 1
    %s217 = scalar_lea.sflag [#allocation5], 1
    %218 = vsyncpa %s217, 1

</llo_original>
